<compile_context>
chip_gen: v7x
topology: tpu7x:2x2x1
jax: 0.10.0
libtpu: 0.0.40
codegen_flags: <defaults>
</compile_context>

<pallas_src>
import functools

import jax
import jax.numpy as jnp
from jax.experimental import pallas as pl
from jax.experimental.pallas import tpu as pltpu


def _round_up(a, b):
    return ((a + b - 1) // b) * b


def _ffn_kernel(x_ref, w1t_ref, w2t_ref, w3t_ref, o_ref):
    """Fused SwiGLU-style feed-forward for one tile of rows.

    x_ref   : (tm, D)  bf16 activations tile
    w1t_ref : (D, H)   bf16 w1 transposed (dim -> hidden)
    w2t_ref : (D, H)   bf16 w2 transposed (applied to swish; D == H)
    w3t_ref : (H, D)   bf16 w3 transposed (applied to x;     D == H)
    o_ref   : (tm, D)  output tile in the original activation dtype
    """
    x = x_ref[...]                                   # bf16, loaded once

    # h1 = w1(x); MXU matmul with f32 accumulation.
    h1 = jnp.dot(x, w1t_ref[...], preferred_element_type=jnp.float32)
    # SiLU in f32: sigmoid rides the EUP slot, multiply on the VPU.
    swish = h1 * jax.nn.sigmoid(h1)

    # h2 = w2(swish); cast back to bf16 for the MXU.
    h2 = jnp.dot(swish.astype(x.dtype), w2t_ref[...],
                 preferred_element_type=jnp.float32)

    # h3 = w3(x)  (reuses the already-loaded x tile).
    h3 = jnp.dot(x, w3t_ref[...], preferred_element_type=jnp.float32)

    o_ref[...] = (h2 * h3).astype(o_ref.dtype)


def prepare_ffn_weights(w1, w2, w3, compute_dtype=jnp.bfloat16):
    """One-time parameter prep (outside the jitted hot path).

    Transposes PyTorch (out_features, in_features) weights to (in, out) and
    casts to the MXU compute dtype so the hot path does no HBM round-trip
    transposes or casts.
    """
    w1t = jnp.asarray(w1).T.astype(compute_dtype)   # (D, H)
    w2t = jnp.asarray(w2).T.astype(compute_dtype)   # (D, H)
    w3t = jnp.asarray(w3).T.astype(compute_dtype)   # (H, D)
    return w1t, w2t, w3t


@functools.partial(jax.jit, static_argnames=("tm",))
def feed_forward(x, w1t, w2t, w3t, *, tm=256):
    """x: (batch, seq, dim). Weights pre-transposed/cast via prepare_ffn_weights."""
    B, S, D = x.shape
    H = w1t.shape[1]
    assert w1t.shape == (D, H) and w2t.shape == (D, H) and w3t.shape == (H, D)
    assert D == H, "This module's forward only type-checks when dim == hidden_dim"

    M = B * S
    # Effective row tile: multiple of 8 (sublane), capped by the (padded) M.
    tm_eff = min(tm, _round_up(M, 8))
    M_pad = _round_up(M, tm_eff)

    compute_dtype = w1t.dtype
    x2d = x.reshape(M, D).astype(compute_dtype)
    if M_pad != M:
        x2d = jnp.pad(x2d, ((0, M_pad - M), (0, 0)))

    # Weights never change across the grid -> single-buffer them (saves VMEM).
    def weight_spec(shape):
        return pl.BlockSpec(shape, lambda i: (0, 0),
                            pipeline_mode=pl.Buffered(buffer_count=1))

    out_itemsize = jnp.dtype(x.dtype).itemsize
    w_itemsize = jnp.dtype(compute_dtype).itemsize
    cost = pl.CostEstimate(
        flops=6 * M_pad * D * H,                       # 3 matmuls x 2*M*D*H
        transcendentals=M_pad * H,                     # sigmoid
        bytes_accessed=(M_pad * D * w_itemsize         # x (bf16)
                        + 3 * D * H * w_itemsize       # weights (bf16)
                        + M_pad * D * out_itemsize),   # output
    )

    out2d = pl.pallas_call(
        _ffn_kernel,
        out_shape=jax.ShapeDtypeStruct((M_pad, D), x.dtype),
        grid_spec=pltpu.PrefetchScalarGridSpec(
            num_scalar_prefetch=0,
            grid=(M_pad // tm_eff,),
            in_specs=[
                pl.BlockSpec((tm_eff, D), lambda i: (i, 0)),   # x rows tile
                weight_spec((D, H)),                            # w1^T (resident)
                weight_spec((D, H)),                            # w2^T (resident)
                weight_spec((H, D)),                            # w3^T (resident)
            ],
            out_specs=pl.BlockSpec((tm_eff, D), lambda i: (i, 0)),
        ),
        compiler_params=pltpu.CompilerParams(
            dimension_semantics=("parallel",)),
        cost_estimate=cost,
    )(x2d, w1t, w2t, w3t)

    return out2d[:M].reshape(B, S, D)


def _reference(x, w1, w2, w3):
    """Pure-JAX f32 reference mirroring the PyTorch forward."""
    h1 = jnp.einsum("bsd,hd->bsh", x, w1)
    swish = h1 * jax.nn.sigmoid(h1)
    return jnp.einsum("bsh,oh->bso", swish, w2) * jnp.einsum("bsd,od->bso", x, w3)


if __name__ == "__main__":
    # Small synthetic config: dim == hidden_dim (required by the module as written).
    # seq=9 makes M=18 non-multiple-of-8 to exercise the ragged-M padding path.
    batch, seq, dim = 2, 9, 256
    hidden = dim

    key = jax.random.PRNGKey(0)
    kx, k1, k2, k3 = jax.random.split(key, 4)

    x = jax.random.normal(kx, (batch, seq, dim), dtype=jnp.float32)

    # nn.Linear default-ish init: U(-1/sqrt(in), 1/sqrt(in)), weights are (out, in).
    def linear_w(k, out_f, in_f):
        bound = 1.0 / (in_f ** 0.5)
        return jax.random.uniform(k, (out_f, in_f), jnp.float32, -bound, bound)

    w1 = linear_w(k1, hidden, dim)   # dim -> hidden
    w2 = linear_w(k2, hidden, dim)   # dim -> hidden (applied to swish)
    w3 = linear_w(k3, dim, hidden)   # hidden -> dim (applied to x)

    # One-time (init-time) weight prep: transpose + bf16 cast, outside jit.
    w1t, w2t, w3t = prepare_ffn_weights(w1, w2, w3)

    out = feed_forward(x, w1t, w2t, w3t, tm=256)
    out = jax.block_until_ready(out)

    ref = _reference(x, w1, w2, w3)
    assert out.shape == (batch, seq, dim)
    # Loosened tolerance: kernel computes the matmuls in bf16 (f32 accumulation).
    max_err = float(jnp.max(jnp.abs(out - ref)))
    assert jnp.allclose(out, ref, atol=2e-2, rtol=2e-2), (
        f"mismatch vs reference (max abs err {max_err})")

    print("KERNEL_OK")
</pallas_src>

<mosaic_0001>
module attributes {stable_mosaic.version = 11 : i64} {
  func.func @_ffn_kernel(%arg0: i32, %arg1: memref<24x256xbf16, #tpu.memory_space<vmem>>, %arg2: memref<256x256xbf16, #tpu.memory_space<vmem>>, %arg3: memref<256x256xbf16, #tpu.memory_space<vmem>>, %arg4: memref<256x256xbf16, #tpu.memory_space<vmem>>, %arg5: memref<24x256xf32, #tpu.memory_space<vmem>>) attributes {dimension_semantics = [#tpu.dimension_semantics<parallel>], iteration_bounds = array<i64: 1>, scalar_prefetch = 0 : i64, scratch_operands = 0 : i64, tpu.core_type = #tpu.core_type<tc>, window_params = [{transform_indices = @transform_0, window_bounds = array<i64: 24, 256>}, {pipeline_mode = #tpu.pipeline_mode<synchronous>, transform_indices = @transform_1, window_bounds = array<i64: 256, 256>}, {pipeline_mode = #tpu.pipeline_mode<synchronous>, transform_indices = @transform_2, window_bounds = array<i64: 256, 256>}, {pipeline_mode = #tpu.pipeline_mode<synchronous>, transform_indices = @transform_3, window_bounds = array<i64: 256, 256>}, {transform_indices = @transform_4, window_bounds = array<i64: 24, 256>}]} {
    %c0 = arith.constant 0 : index
    %c0_0 = arith.constant 0 : index
    %0 = vector.load %arg1[%c0, %c0_0] : memref<24x256xbf16, #tpu.memory_space<vmem>>, vector<24x256xbf16>
    %c0_1 = arith.constant 0 : index
    %c0_2 = arith.constant 0 : index
    %1 = vector.load %arg2[%c0_1, %c0_2] : memref<256x256xbf16, #tpu.memory_space<vmem>>, vector<256x256xbf16>
    %cst = arith.constant dense<0.000000e+00> : vector<24x256xf32>
    %2 = tpu.matmul %0, %1, %cst {dimension_numbers = #tpu.dot_dimension_numbers<[1], [0], [0], [1], [0, 0, 1, 1], [], []>} : vector<24x256xbf16>, vector<256x256xbf16>, vector<24x256xf32> -> vector<24x256xf32>
    %3 = arith.negf %2 : vector<24x256xf32>
    %4 = math.exp %3 : vector<24x256xf32>
    %cst_3 = arith.constant 1.000000e+00 : f32
    %5 = vector.broadcast %cst_3 : f32 to vector<24x256xf32>
    %6 = arith.addf %5, %4 : vector<24x256xf32>
    %7 = arith.divf %5, %6 : vector<24x256xf32>
    %8 = arith.mulf %2, %7 : vector<24x256xf32>
    %9 = arith.truncf %8 : vector<24x256xf32> to vector<24x256xbf16>
    %c0_4 = arith.constant 0 : index
    %c0_5 = arith.constant 0 : index
    %10 = vector.load %arg3[%c0_4, %c0_5] : memref<256x256xbf16, #tpu.memory_space<vmem>>, vector<256x256xbf16>
    %cst_6 = arith.constant dense<0.000000e+00> : vector<24x256xf32>
    %11 = tpu.matmul %9, %10, %cst_6 {dimension_numbers = #tpu.dot_dimension_numbers<[1], [0], [0], [1], [0, 0, 1, 1], [], []>} : vector<24x256xbf16>, vector<256x256xbf16>, vector<24x256xf32> -> vector<24x256xf32>
    %c0_7 = arith.constant 0 : index
    %c0_8 = arith.constant 0 : index
    %12 = vector.load %arg4[%c0_7, %c0_8] : memref<256x256xbf16, #tpu.memory_space<vmem>>, vector<256x256xbf16>
    %cst_9 = arith.constant dense<0.000000e+00> : vector<24x256xf32>
    %13 = tpu.matmul %0, %12, %cst_9 {dimension_numbers = #tpu.dot_dimension_numbers<[1], [0], [0], [1], [0, 0, 1, 1], [], []>} : vector<24x256xbf16>, vector<256x256xbf16>, vector<24x256xf32> -> vector<24x256xf32>
    %14 = arith.mulf %11, %13 : vector<24x256xf32>
    %c0_10 = arith.constant 0 : index
    %c0_11 = arith.constant 0 : index
    %15 = vector.load %arg5[%c0_10, %c0_11] : memref<24x256xf32, #tpu.memory_space<vmem>>, vector<24x256xf32>
    tpu.vector_store %arg5[%c0_10, %c0_11], %14 {strides = array<i32>} : memref<24x256xf32, #tpu.memory_space<vmem>>, vector<24x256xf32>,
    return
  }
  func.func @transform_0(%arg0: i32) -> (i32, i32) {
    %c0_i32 = arith.constant 0 : i32
    %c0_i32_0 = arith.constant 0 : i32
    return %arg0, %c0_i32 : i32, i32
  }
  func.func @transform_1(%arg0: i32) -> (i32, i32) {
    %c0_i32 = arith.constant 0 : i32
    %c0_i32_0 = arith.constant 0 : i32
    %c0_i32_1 = arith.constant 0 : i32
    return %c0_i32, %c0_i32_0 : i32, i32
  }
  func.func @transform_2(%arg0: i32) -> (i32, i32) {
    %c0_i32 = arith.constant 0 : i32
    %c0_i32_0 = arith.constant 0 : i32
    %c0_i32_1 = arith.constant 0 : i32
    return %c0_i32, %c0_i32_0 : i32, i32
  }
  func.func @transform_3(%arg0: i32) -> (i32, i32) {
    %c0_i32 = arith.constant 0 : i32
    %c0_i32_0 = arith.constant 0 : i32
    %c0_i32_1 = arith.constant 0 : i32
    return %c0_i32, %c0_i32_0 : i32, i32
  }
  func.func @transform_4(%arg0: i32) -> (i32, i32) {
    %c0_i32 = arith.constant 0 : i32
    %c0_i32_0 = arith.constant 0 : i32
    return %arg0, %c0_i32 : i32, i32
  }
}

</mosaic_0001>

<llo_original>
// kernel: feed_forward.1
$region0: #{feed_forward.1}
  #allocation0 [shape = 'u32[]', space=smem, size = 0x4, offset = 0x4, fixed_abs, tag = 'smem constant byte address 0x4 - core index']
  #allocation1 [shape = 'u32[144,128]{1,0:T(1,128)}', space=vmem, size = 0x12000, scoped, tag = 'internal scratch']
  %s0 = inlined_call_operand.vmem [shape: bf16[24,256], index: 0, kind: input, shape index: {}]
  %s1 = inlined_call_operand.hbm [shape: bf16[256,256], index: 1, kind: input, shape index: {}]
  %s2 = inlined_call_operand.hbm [shape: bf16[256,256], index: 2, kind: input, shape index: {}]
  %s3 = inlined_call_operand.hbm [shape: bf16[256,256], index: 3, kind: input, shape index: {}]
  %s4 = inlined_call_operand.vmem [shape: f32[24,256], index: 4, kind: output, shape index: {}]
  %s5 = sld [smem:[#allocation0]]
  $region38: #{feed_forward.1} parent=0
    _
  %s7 = ssub.s32 1, %s5
  %s8 = scalar_select 0, %s7, %s5
  $region1: #{feed_forward.1} parent=0
    #allocation2 [shape = 'u8[131072]{0}', space=vmem, size = 0x20000, scoped, tag = 'input window, operand 1, single buffered']
    #allocation3 [shape = 's32[1]{0}', space=sflag, size = 0x4, scoped, tag = 'scoped memory for feed_forward.1']
    #allocation4 [shape = 'u8[131072]{0}', space=vmem, size = 0x20000, scoped, tag = 'input window, operand 2, single buffered']
    #allocation5 [shape = 's32[1]{0}', space=sflag, size = 0x4, scoped, tag = 'scoped memory for feed_forward.1']
    #allocation6 [shape = 'u8[131072]{0}', space=vmem, size = 0x20000, scoped, tag = 'input window, operand 3, single buffered']
    %9 = vsyncpa [#allocation3], 0
    %10 = vsyncpa [#allocation5], 0
    // Predicated region
    $region2: #{feed_forward.1} parent=1 // pred_check
      _
    $region3: #{feed_forward.1} parent=1 // pred_check_branch
      %12 = sbr.rel (0) target = $region5
    $region4: #{feed_forward.1} parent=1 // pred_region
      _
    $region5: #{feed_forward.1} parent=1 // pred_fallthru
      _
    // Predicated region
    $region6: #{feed_forward.1} parent=1 // pred_check
      _
    $region7: #{feed_forward.1} parent=1 // pred_check_branch
      %14 = sbr.rel (0) target = $region9
    $region8: #{feed_forward.1} parent=1 // pred_region
      %s16 = ssub.s32 4096, 4096
      %17 = vsyncadd [#allocation3], %s16
      %s18 = sshll.u32 [#allocation2], 4
      %s19 = int_to_ptr.vmem [resolvable:$true] %s18
      %24 = dma.hbm_to_vmem [thread:$0]  %s1, 4096, %s19, [#allocation3], 128, 128, 8
    $region9: #{feed_forward.1} parent=1 // pred_fallthru
      _
    // Predicated region
    $region10: #{feed_forward.1} parent=1 // pred_check
      _
    $region11: #{feed_forward.1} parent=1 // pred_check_branch
      %26 = sbr.rel (0) target = $region13
    $region12: #{feed_forward.1} parent=1 // pred_region
      %s28 = ssub.s32 4096, 4096
      %29 = vsyncadd [#allocation5], %s28
      %s30 = sshll.u32 [#allocation4], 4
      %s31 = int_to_ptr.vmem [resolvable:$true] %s30
      %36 = dma.hbm_to_vmem [thread:$0]  %s2, 4096, %s31, [#allocation5], 128, 128, 8
    $region13: #{feed_forward.1} parent=1 // pred_fallthru
      _
    // Predicated region
    $region14: #{feed_forward.1} parent=1 // pred_check
      _
    $region15: #{feed_forward.1} parent=1 // pred_check_branch
      %38 = sbr.rel (0) target = $region17
    $region16: #{feed_forward.1} parent=1 // pred_region
      %s40 = ssub.s32 4096, 4096
      %41 = vsyncadd [#allocation5], %s40
      %s42 = sshll.u32 [#allocation6], 4
      %s43 = int_to_ptr.vmem [resolvable:$true] %s42
      %48 = dma.hbm_to_vmem [thread:$0]  %s3, 4096, %s43, [#allocation5], 128, 128, 8
    $region17: #{feed_forward.1} parent=1 // pred_fallthru
      _
    // Predicated region
    $region18: #{feed_forward.1} parent=1 // pred_check
      _
    $region19: #{feed_forward.1} parent=1 // pred_check_branch
      %50 = sbr.rel (0) target = $region21
    $region20: #{feed_forward.1} parent=1 // pred_region
      %51 = dma.done [#allocation3], 4096
    $region21: #{feed_forward.1} parent=1 // pred_fallthru
      _
    // Predicated region
    $region22: #{feed_forward.1} parent=1 // pred_check
      _
    $region23: #{feed_forward.1} parent=1 // pred_check_branch
      %53 = sbr.rel (0) target = $region25
    $region24: #{feed_forward.1} parent=1 // pred_region
      %54 = dma.done [#allocation5], 4096
    $region25: #{feed_forward.1} parent=1 // pred_fallthru
      _
    // Predicated region
    $region26: #{feed_forward.1} parent=1 // pred_check
      _
    $region27: #{feed_forward.1} parent=1 // pred_check_branch
      %56 = sbr.rel (0) target = $region29
    $region28: #{feed_forward.1} parent=1 // pred_region
      %57 = dma.done [#allocation5], 4096
    $region29: #{feed_forward.1} parent=1 // pred_fallthru
      _
    %v58 = vld [vmem:[%s0] sm:$0xff]
    %v59 = vld [vmem:[%s0 + $0x8] sm:$0xff]
    %v60 = vld [vmem:[%s0 + $0x10] sm:$0xff]
    %v61 = vld [vmem:[#allocation2] sm:$0xff]
    %v62 = vld [vmem:[#allocation2 + $0x8] sm:$0xff]
    %v63 = vld [vmem:[#allocation2 + $0x10] sm:$0xff]
    %v64 = vld [vmem:[#allocation2 + $0x18] sm:$0xff]
    %v65 = vld [vmem:[#allocation2 + $0x20] sm:$0xff]
    %v66 = vld [vmem:[#allocation2 + $0x28] sm:$0xff]
    %v67 = vld [vmem:[#allocation2 + $0x30] sm:$0xff]
    %v68 = vld [vmem:[#allocation2 + $0x38] sm:$0xff]
    %v69 = vld [vmem:[#allocation2 + $0x40] sm:$0xff]
    %v70 = vld [vmem:[#allocation2 + $0x48] sm:$0xff]
    %v71 = vld [vmem:[#allocation2 + $0x50] sm:$0xff]
    %v72 = vld [vmem:[#allocation2 + $0x58] sm:$0xff]
    %v73 = vld [vmem:[#allocation2 + $0x60] sm:$0xff]
    %v74 = vld [vmem:[#allocation2 + $0x68] sm:$0xff]
    %v75 = vld [vmem:[#allocation2 + $0x70] sm:$0xff]
    %v76 = vld [vmem:[#allocation2 + $0x78] sm:$0xff]
    %v77 = vld [vmem:[#allocation2 + $0x80] sm:$0xff]
    %v78 = vld [vmem:[#allocation2 + $0x88] sm:$0xff]
    %v79 = vld [vmem:[#allocation2 + $0x90] sm:$0xff]
    %v80 = vld [vmem:[#allocation2 + $0x98] sm:$0xff]
    %v81 = vld [vmem:[#allocation2 + $0xa0] sm:$0xff]
    %v82 = vld [vmem:[#allocation2 + $0xa8] sm:$0xff]
    %v83 = vld [vmem:[#allocation2 + $0xb0] sm:$0xff]
    %v84 = vld [vmem:[#allocation2 + $0xb8] sm:$0xff]
    %v85 = vld [vmem:[#allocation2 + $0xc0] sm:$0xff]
    %v86 = vld [vmem:[#allocation2 + $0xc8] sm:$0xff]
    %v87 = vld [vmem:[#allocation2 + $0xd0] sm:$0xff]
    %v88 = vld [vmem:[#allocation2 + $0xd8] sm:$0xff]
    %v89 = vld [vmem:[#allocation2 + $0xe0] sm:$0xff]
    %v90 = vld [vmem:[#allocation2 + $0xe8] sm:$0xff]
    %v91 = vld [vmem:[#allocation2 + $0xf0] sm:$0xff]
    %v92 = vld [vmem:[#allocation2 + $0xf8] sm:$0xff]
    %v96 = vunpack.c.l.b16 %v58
    %v97 = vunpack.c.h.b16 %v58
    %v98 = vunpack.c.l.b16 %v59
    %v99 = vunpack.c.h.b16 %v59
    %v100 = vunpack.c.l.b16 %v60
    %v101 = vunpack.c.h.b16 %v60
    %v102 = vpack.c.b16 %v98, %v96
    %v103 = vpack.c.b16 %v99, %v97
    %v104 = vpack.c.b16 %v100, %v100
    %v105 = vpack.c.b16 %v101, %v101
    %v142 = vunpack.c.l.b16 %v61
    %v143 = vunpack.c.h.b16 %v61
    %v144 = vunpack.c.l.b16 %v62
    %v145 = vunpack.c.h.b16 %v62
    %v146 = vunpack.c.l.b16 %v63
    %v147 = vunpack.c.h.b16 %v63
    %v148 = vunpack.c.l.b16 %v64
    %v149 = vunpack.c.h.b16 %v64
    %v150 = vunpack.c.l.b16 %v65
    %v151 = vunpack.c.h.b16 %v65
    %v152 = vunpack.c.l.b16 %v66
    %v153 = vunpack.c.h.b16 %v66
    %v154 = vunpack.c.l.b16 %v67
    %v155 = vunpack.c.h.b16 %v67
    %v156 = vunpack.c.l.b16 %v68
    %v157 = vunpack.c.h.b16 %v68
    %v158 = vunpack.c.l.b16 %v69
    %v159 = vunpack.c.h.b16 %v69
    %v160 = vunpack.c.l.b16 %v70
    %v161 = vunpack.c.h.b16 %v70
    %v162 = vunpack.c.l.b16 %v71
    %v163 = vunpack.c.h.b16 %v71
    %v164 = vunpack.c.l.b16 %v72
    %v165 = vunpack.c.h.b16 %v72
    %v166 = vunpack.c.l.b16 %v73
    %v167 = vunpack.c.h.b16 %v73
    %v168 = vunpack.c.l.b16 %v74
    %v169 = vunpack.c.h.b16 %v74
    %v170 = vunpack.c.l.b16 %v75
    %v171 = vunpack.c.h.b16 %v75
    %v172 = vunpack.c.l.b16 %v76
    %v173 = vunpack.c.h.b16 %v76
    %v174 = vunpack.c.l.b16 %v77
    %v175 = vunpack.c.h.b16 %v77
    %v176 = vunpack.c.l.b16 %v78
    %v177 = vunpack.c.h.b16 %v78
    %v178 = vunpack.c.l.b16 %v79
    %v179 = vunpack.c.h.b16 %v79
    %v180 = vunpack.c.l.b16 %v80
    %v181 = vunpack.c.h.b16 %v80
    %v182 = vunpack.c.l.b16 %v81
    %v183 = vunpack.c.h.b16 %v81
    %v184 = vunpack.c.l.b16 %v82
    %v185 = vunpack.c.h.b16 %v82
    %v186 = vunpack.c.l.b16 %v83
    %v187 = vunpack.c.h.b16 %v83
    %v188 = vunpack.c.l.b16 %v84
    %v189 = vunpack.c.h.b16 %v84
    %v190 = vunpack.c.l.b16 %v85
    %v191 = vunpack.c.h.b16 %v85
    %v192 = vunpack.c.l.b16 %v86
    %v193 = vunpack.c.h.b16 %v86
    %v194 = vunpack.c.l.b16 %v87
    %v195 = vunpack.c.h.b16 %v87
    %v196 = vunpack.c.l.b16 %v88
    %v197 = vunpack.c.h.b16 %v88
    %v198 = vunpack.c.l.b16 %v89
    %v199 = vunpack.c.h.b16 %v89
    %v200 = vunpack.c.l.b16 %v90
    %v201 = vunpack.c.h.b16 %v90
    %v202 = vunpack.c.l.b16 %v91
    %v203 = vunpack.c.h.b16 %v91
    %v204 = vunpack.c.l.b16 %v92
    %v205 = vunpack.c.h.b16 %v92
    %v206 = vpack.c.b16 %v144, %v142
    %v207 = vpack.c.b16 %v145, %v143
    %v208 = vpack.c.b16 %v148, %v146
    %v209 = vpack.c.b16 %v149, %v147
    %v210 = vpack.c.b16 %v152, %v150
    %v211 = vpack.c.b16 %v153, %v151
    %v212 = vpack.c.b16 %v156, %v154
    %v213 = vpack.c.b16 %v157, %v155
    %v214 = vpack.c.b16 %v160, %v158
    %v215 = vpack.c.b16 %v161, %v159
    %v216 = vpack.c.b16 %v164, %v162
    %v217 = vpack.c.b16 %v165, %v163
    %v218 = vpack.c.b16 %v168, %v166
    %v219 = vpack.c.b16 %v169, %v167
    %v220 = vpack.c.b16 %v172, %v170
    %v221 = vpack.c.b16 %v173, %v171
    %v222 = vpack.c.b16 %v176, %v174
    %v223 = vpack.c.b16 %v177, %v175
    %v224 = vpack.c.b16 %v180, %v178
    %v225 = vpack.c.b16 %v181, %v179
    %v226 = vpack.c.b16 %v184, %v182
    %v227 = vpack.c.b16 %v185, %v183
    %v228 = vpack.c.b16 %v188, %v186
    %v229 = vpack.c.b16 %v189, %v187
    %v230 = vpack.c.b16 %v192, %v190
    %v231 = vpack.c.b16 %v193, %v191
    %v232 = vpack.c.b16 %v196, %v194
    %v233 = vpack.c.b16 %v197, %v195
    %v234 = vpack.c.b16 %v200, %v198
    %v235 = vpack.c.b16 %v201, %v199
    %v236 = vpack.c.b16 %v204, %v202
    %v237 = vpack.c.b16 %v205, %v203
    %270 = vmatprep.subr.bf16.mxu0 %v207
    %271 = vmatpush1.bf16.msra.mxu0 %v206
    %272 = vmatprep.subr.bf16.mxu0 %v209
    %273 = vmatpush1.bf16.msra.mxu0 %v208
    %274 = vmatprep.subr.bf16.mxu0 %v211
    %275 = vmatpush1.bf16.msra.mxu0 %v210
    %276 = vmatprep.subr.bf16.mxu0 %v213
    %277 = vmatpush1.bf16.msra.mxu0 %v212
    %278 = vmatprep.subr.bf16.mxu0 %v215
    %279 = vmatpush1.bf16.msra.mxu0 %v214
    %280 = vmatprep.subr.bf16.mxu0 %v217
    %281 = vmatpush1.bf16.msra.mxu0 %v216
    %282 = vmatprep.subr.bf16.mxu0 %v219
    %283 = vmatpush1.bf16.msra.mxu0 %v218
    %284 = vmatprep.subr.bf16.mxu0 %v221
    %285 = vmatpush1.bf16.msra.mxu0 %v220
    %286 = vmatprep.subr.bf16.mxu0 %v223
    %287 = vmatpush1.bf16.msra.mxu0 %v222
    %288 = vmatprep.subr.bf16.mxu0 %v225
    %289 = vmatpush1.bf16.msra.mxu0 %v224
    %290 = vmatprep.subr.bf16.mxu0 %v227
    %291 = vmatpush1.bf16.msra.mxu0 %v226
    %292 = vmatprep.subr.bf16.mxu0 %v229
    %293 = vmatpush1.bf16.msra.mxu0 %v228
    %294 = vmatprep.subr.bf16.mxu0 %v231
    %295 = vmatpush1.bf16.msra.mxu0 %v230
    %296 = vmatprep.subr.bf16.mxu0 %v233
    %297 = vmatpush1.bf16.msra.mxu0 %v232
    %298 = vmatprep.subr.bf16.mxu0 %v235
    %299 = vmatpush1.bf16.msra.mxu0 %v234
    %300 = vmatprep.subr.bf16.mxu0 %v237
    %301 = vmatpush1.bf16.msra.mxu0 %v236
    %302 = vmatprep.mubr.bf16.mxu0 %v103
    %303 = vmatmul.mubr.bf16.gmra.mrb[0].mxu0 %v102
    %v304 = vpop.f32.mrb[0].mxu0
    %v305 = vadd.f32 0.0, %v304
    %v306 = vpop.f32.mrb[0].mxu0
    %v307 = vadd.f32 0.0, %v306
    %v308 = vpop.f32.mrb[0].mxu0
    %v309 = vadd.f32 0.0, %v308
    %v310 = vpop.f32.mrb[0].mxu0
    %v311 = vadd.f32 0.0, %v310
    %312 = vmatprep.mubr.bf16.mxu0 %v105
    %313 = vmatmul.mubr.bf16.gmra.mrb[0].mxu0 %v104
    %v314 = vpop.f32.mrb[0].mxu0
    %v315 = vadd.f32 0.0, %v314
    %v316 = vpop.f32.mrb[0].mxu0
    %v317 = vadd.f32 0.0, %v316
    %v318 = vpop.f32.mrb[0].mxu0
    %v319 = vpop.f32.mrb[0].mxu0
    %320 = vdwg.mxu0
    %v321 = vxor.u32 %v305, 2147483648
    %v322 = vxor.u32 %v307, 2147483648
    %v323 = vxor.u32 %v309, 2147483648
    %v324 = vxor.u32 %v311, 2147483648
    %v325 = vxor.u32 %v315, 2147483648
    %v326 = vxor.u32 %v317, 2147483648
    %v327 = vmul.f32 %v321, 1.442695
    %v328 = vpow.pop %v327
    %v329 = vmul.f32 %v322, 1.442695
    %v330 = vpow.pop %v329
    %v331 = vmul.f32 %v323, 1.442695
    %v332 = vpow.pop %v331
    %v333 = vmul.f32 %v324, 1.442695
    %v334 = vpow.pop %v333
    %v335 = vmul.f32 %v325, 1.442695
    %v336 = vpow.pop %v335
    %v337 = vmul.f32 %v326, 1.442695
    %v338 = vpow.pop %v337
    %v339 = vadd.f32 %v328, 1.0
    %v340 = vadd.f32 %v330, 1.0
    %v341 = vadd.f32 %v332, 1.0
    %v342 = vadd.f32 %v334, 1.0
    %v343 = vadd.f32 %v336, 1.0
    %v344 = vadd.f32 %v338, 1.0
    %v345 = vrcp.pop %v339
    %v346 = vmul.f32 1.0, %v345
    %v347 = vrcp.pop %v340
    %v348 = vmul.f32 1.0, %v347
    %v349 = vrcp.pop %v341
    %v350 = vmul.f32 1.0, %v349
    %v351 = vrcp.pop %v342
    %v352 = vmul.f32 1.0, %v351
    %v353 = vrcp.pop %v343
    %v354 = vmul.f32 1.0, %v353
    %v355 = vrcp.pop %v344
    %v356 = vmul.f32 1.0, %v355
    %v357 = vmul.f32 %v305, %v346
    %v358 = vmul.f32 %v307, %v348
    %v359 = vmul.f32 %v309, %v350
    %v360 = vmul.f32 %v311, %v352
    %v361 = vmul.f32 %v315, %v354
    %v362 = vmul.f32 %v317, %v356
    %v363 = vpack.c.bf16 %v359, %v357
    %v364 = vpack.c.bf16 %v360, %v358
    %v365 = vpack.c.bf16 %v361, %v361
    %v366 = vpack.c.bf16 %v362, %v362
    %v367 = vld [vmem:[#allocation4] sm:$0xff]
    %v368 = vld [vmem:[#allocation4 + $0x8] sm:$0xff]
    %v369 = vld [vmem:[#allocation4 + $0x10] sm:$0xff]
    %v370 = vld [vmem:[#allocation4 + $0x18] sm:$0xff]
    %v371 = vld [vmem:[#allocation4 + $0x20] sm:$0xff]
    %v372 = vld [vmem:[#allocation4 + $0x28] sm:$0xff]
    %v373 = vld [vmem:[#allocation4 + $0x30] sm:$0xff]
    %v374 = vld [vmem:[#allocation4 + $0x38] sm:$0xff]
    %v375 = vld [vmem:[#allocation4 + $0x40] sm:$0xff]
    %v376 = vld [vmem:[#allocation4 + $0x48] sm:$0xff]
    %v377 = vld [vmem:[#allocation4 + $0x50] sm:$0xff]
    %v378 = vld [vmem:[#allocation4 + $0x58] sm:$0xff]
    %v379 = vld [vmem:[#allocation4 + $0x60] sm:$0xff]
    %v380 = vld [vmem:[#allocation4 + $0x68] sm:$0xff]
    %v381 = vld [vmem:[#allocation4 + $0x70] sm:$0xff]
    %v382 = vld [vmem:[#allocation4 + $0x78] sm:$0xff]
    %v383 = vld [vmem:[#allocation4 + $0x80] sm:$0xff]
    %v384 = vld [vmem:[#allocation4 + $0x88] sm:$0xff]
    %v385 = vld [vmem:[#allocation4 + $0x90] sm:$0xff]
    %v386 = vld [vmem:[#allocation4 + $0x98] sm:$0xff]
    %v387 = vld [vmem:[#allocation4 + $0xa0] sm:$0xff]
    %v388 = vld [vmem:[#allocation4 + $0xa8] sm:$0xff]
    %v389 = vld [vmem:[#allocation4 + $0xb0] sm:$0xff]
    %v390 = vld [vmem:[#allocation4 + $0xb8] sm:$0xff]
    %v391 = vld [vmem:[#allocation4 + $0xc0] sm:$0xff]
    %v392 = vld [vmem:[#allocation4 + $0xc8] sm:$0xff]
    %v393 = vld [vmem:[#allocation4 + $0xd0] sm:$0xff]
    %v394 = vld [vmem:[#allocation4 + $0xd8] sm:$0xff]
    %v395 = vld [vmem:[#allocation4 + $0xe0] sm:$0xff]
    %v396 = vld [vmem:[#allocation4 + $0xe8] sm:$0xff]
    %v397 = vld [vmem:[#allocation4 + $0xf0] sm:$0xff]
    %v398 = vld [vmem:[#allocation4 + $0xf8] sm:$0xff]
    %v431 = vunpack.c.l.b16 %v367
    %v432 = vunpack.c.h.b16 %v367
    %v433 = vunpack.c.l.b16 %v368
    %v434 = vunpack.c.h.b16 %v368
    %v435 = vunpack.c.l.b16 %v369
    %v436 = vunpack.c.h.b16 %v369
    %v437 = vunpack.c.l.b16 %v370
    %v438 = vunpack.c.h.b16 %v370
    %v439 = vunpack.c.l.b16 %v371
    %v440 = vunpack.c.h.b16 %v371
    %v441 = vunpack.c.l.b16 %v372
    %v442 = vunpack.c.h.b16 %v372
    %v443 = vunpack.c.l.b16 %v373
    %v444 = vunpack.c.h.b16 %v373
    %v445 = vunpack.c.l.b16 %v374
    %v446 = vunpack.c.h.b16 %v374
    %v447 = vunpack.c.l.b16 %v375
    %v448 = vunpack.c.h.b16 %v375
    %v449 = vunpack.c.l.b16 %v376
    %v450 = vunpack.c.h.b16 %v376
    %v451 = vunpack.c.l.b16 %v377
    %v452 = vunpack.c.h.b16 %v377
    %v453 = vunpack.c.l.b16 %v378
    %v454 = vunpack.c.h.b16 %v378
    %v455 = vunpack.c.l.b16 %v379
    %v456 = vunpack.c.h.b16 %v379
    %v457 = vunpack.c.l.b16 %v380
    %v458 = vunpack.c.h.b16 %v380
    %v459 = vunpack.c.l.b16 %v381
    %v460 = vunpack.c.h.b16 %v381
    %v461 = vunpack.c.l.b16 %v382
    %v462 = vunpack.c.h.b16 %v382
    %v463 = vunpack.c.l.b16 %v383
    %v464 = vunpack.c.h.b16 %v383
    %v465 = vunpack.c.l.b16 %v384
    %v466 = vunpack.c.h.b16 %v384
    %v467 = vunpack.c.l.b16 %v385
    %v468 = vunpack.c.h.b16 %v385
    %v469 = vunpack.c.l.b16 %v386
    %v470 = vunpack.c.h.b16 %v386
    %v471 = vunpack.c.l.b16 %v387
    %v472 = vunpack.c.h.b16 %v387
    %v473 = vunpack.c.l.b16 %v388
    %v474 = vunpack.c.h.b16 %v388
    %v475 = vunpack.c.l.b16 %v389
    %v476 = vunpack.c.h.b16 %v389
    %v477 = vunpack.c.l.b16 %v390
    %v478 = vunpack.c.h.b16 %v390
    %v479 = vunpack.c.l.b16 %v391
    %v480 = vunpack.c.h.b16 %v391
    %v481 = vunpack.c.l.b16 %v392
    %v482 = vunpack.c.h.b16 %v392
    %v483 = vunpack.c.l.b16 %v393
    %v484 = vunpack.c.h.b16 %v393
    %v485 = vunpack.c.l.b16 %v394
    %v486 = vunpack.c.h.b16 %v394
    %v487 = vunpack.c.l.b16 %v395
    %v488 = vunpack.c.h.b16 %v395
    %v489 = vunpack.c.l.b16 %v396
    %v490 = vunpack.c.h.b16 %v396
    %v491 = vunpack.c.l.b16 %v397
    %v492 = vunpack.c.h.b16 %v397
    %v493 = vunpack.c.l.b16 %v398
    %v494 = vunpack.c.h.b16 %v398
    %v495 = vpack.c.b16 %v433, %v431
    %v496 = vpack.c.b16 %v434, %v432
    %v497 = vpack.c.b16 %v437, %v435
    %v498 = vpack.c.b16 %v438, %v436
    %v499 = vpack.c.b16 %v441, %v439
    %v500 = vpack.c.b16 %v442, %v440
    %v501 = vpack.c.b16 %v445, %v443
    %v502 = vpack.c.b16 %v446, %v444
    %v503 = vpack.c.b16 %v449, %v447
    %v504 = vpack.c.b16 %v450, %v448
    %v505 = vpack.c.b16 %v453, %v451
    %v506 = vpack.c.b16 %v454, %v452
    %v507 = vpack.c.b16 %v457, %v455
    %v508 = vpack.c.b16 %v458, %v456
    %v509 = vpack.c.b16 %v461, %v459
    %v510 = vpack.c.b16 %v462, %v460
    %v511 = vpack.c.b16 %v465, %v463
    %v512 = vpack.c.b16 %v466, %v464
    %v513 = vpack.c.b16 %v469, %v467
    %v514 = vpack.c.b16 %v470, %v468
    %v515 = vpack.c.b16 %v473, %v471
    %v516 = vpack.c.b16 %v474, %v472
    %v517 = vpack.c.b16 %v477, %v475
    %v518 = vpack.c.b16 %v478, %v476
    %v519 = vpack.c.b16 %v481, %v479
    %v520 = vpack.c.b16 %v482, %v480
    %v521 = vpack.c.b16 %v485, %v483
    %v522 = vpack.c.b16 %v486, %v484
    %v523 = vpack.c.b16 %v489, %v487
    %v524 = vpack.c.b16 %v490, %v488
    %v525 = vpack.c.b16 %v493, %v491
    %v526 = vpack.c.b16 %v494, %v492
    %559 = vmatprep.subr.bf16.mxu0 %v496
    %560 = vmatpush1.bf16.msra.mxu0 %v495
    %561 = vmatprep.subr.bf16.mxu0 %v498
    %562 = vmatpush1.bf16.msra.mxu0 %v497
    %563 = vmatprep.subr.bf16.mxu0 %v500
    %564 = vmatpush1.bf16.msra.mxu0 %v499
    %565 = vmatprep.subr.bf16.mxu0 %v502
    %566 = vmatpush1.bf16.msra.mxu0 %v501
    %567 = vmatprep.subr.bf16.mxu0 %v504
    %568 = vmatpush1.bf16.msra.mxu0 %v503
    %569 = vmatprep.subr.bf16.mxu0 %v506
    %570 = vmatpush1.bf16.msra.mxu0 %v505
    %571 = vmatprep.subr.bf16.mxu0 %v508
    %572 = vmatpush1.bf16.msra.mxu0 %v507
    %573 = vmatprep.subr.bf16.mxu0 %v510
    %574 = vmatpush1.bf16.msra.mxu0 %v509
    %575 = vmatprep.subr.bf16.mxu0 %v512
    %576 = vmatpush1.bf16.msra.mxu0 %v511
    %577 = vmatprep.subr.bf16.mxu0 %v514
    %578 = vmatpush1.bf16.msra.mxu0 %v513
    %579 = vmatprep.subr.bf16.mxu0 %v516
    %580 = vmatpush1.bf16.msra.mxu0 %v515
    %581 = vmatprep.subr.bf16.mxu0 %v518
    %582 = vmatpush1.bf16.msra.mxu0 %v517
    %583 = vmatprep.subr.bf16.mxu0 %v520
    %584 = vmatpush1.bf16.msra.mxu0 %v519
    %585 = vmatprep.subr.bf16.mxu0 %v522
    %586 = vmatpush1.bf16.msra.mxu0 %v521
    %587 = vmatprep.subr.bf16.mxu0 %v524
    %588 = vmatpush1.bf16.msra.mxu0 %v523
    %589 = vmatprep.subr.bf16.mxu0 %v526
    %590 = vmatpush1.bf16.msra.mxu0 %v525
    %591 = vmatprep.mubr.bf16.mxu0 %v364
    %592 = vmatmul.mubr.bf16.gmra.mrb[0].mxu0 %v363
    %v593 = vpop.f32.mrb[0].mxu0
    %v594 = vadd.f32 0.0, %v593
    %v595 = vpop.f32.mrb[0].mxu0
    %v596 = vadd.f32 0.0, %v595
    %v597 = vpop.f32.mrb[0].mxu0
    %v598 = vadd.f32 0.0, %v597
    %v599 = vpop.f32.mrb[0].mxu0
    %v600 = vadd.f32 0.0, %v599
    %601 = vmatprep.mubr.bf16.mxu0 %v366
    %602 = vmatmul.mubr.bf16.gmra.mrb[0].mxu0 %v365
    %v603 = vpop.f32.mrb[0].mxu0
    %v604 = vadd.f32 0.0, %v603
    %v605 = vpop.f32.mrb[0].mxu0
    %v606 = vadd.f32 0.0, %v605
    %v607 = vpop.f32.mrb[0].mxu0
    %v608 = vpop.f32.mrb[0].mxu0
    %609 = vdwg.mxu0
    %v610 = vld [vmem:[#allocation6] sm:$0xff]
    %v611 = vld [vmem:[#allocation6 + $0x8] sm:$0xff]
    %v612 = vld [vmem:[#allocation6 + $0x10] sm:$0xff]
    %v613 = vld [vmem:[#allocation6 + $0x18] sm:$0xff]
    %v614 = vld [vmem:[#allocation6 + $0x20] sm:$0xff]
    %v615 = vld [vmem:[#allocation6 + $0x28] sm:$0xff]
    %v616 = vld [vmem:[#allocation6 + $0x30] sm:$0xff]
    %v617 = vld [vmem:[#allocation6 + $0x38] sm:$0xff]
    %v618 = vld [vmem:[#allocation6 + $0x40] sm:$0xff]
    %v619 = vld [vmem:[#allocation6 + $0x48] sm:$0xff]
    %v620 = vld [vmem:[#allocation6 + $0x50] sm:$0xff]
    %v621 = vld [vmem:[#allocation6 + $0x58] sm:$0xff]
    %v622 = vld [vmem:[#allocation6 + $0x60] sm:$0xff]
    %v623 = vld [vmem:[#allocation6 + $0x68] sm:$0xff]
    %v624 = vld [vmem:[#allocation6 + $0x70] sm:$0xff]
    %v625 = vld [vmem:[#allocation6 + $0x78] sm:$0xff]
    %v626 = vld [vmem:[#allocation6 + $0x80] sm:$0xff]
    %v627 = vld [vmem:[#allocation6 + $0x88] sm:$0xff]
    %v628 = vld [vmem:[#allocation6 + $0x90] sm:$0xff]
    %v629 = vld [vmem:[#allocation6 + $0x98] sm:$0xff]
    %v630 = vld [vmem:[#allocation6 + $0xa0] sm:$0xff]
    %v631 = vld [vmem:[#allocation6 + $0xa8] sm:$0xff]
    %v632 = vld [vmem:[#allocation6 + $0xb0] sm:$0xff]
    %v633 = vld [vmem:[#allocation6 + $0xb8] sm:$0xff]
    %v634 = vld [vmem:[#allocation6 + $0xc0] sm:$0xff]
    %v635 = vld [vmem:[#allocation6 + $0xc8] sm:$0xff]
    %v636 = vld [vmem:[#allocation6 + $0xd0] sm:$0xff]
    %v637 = vld [vmem:[#allocation6 + $0xd8] sm:$0xff]
    %v638 = vld [vmem:[#allocation6 + $0xe0] sm:$0xff]
    %v639 = vld [vmem:[#allocation6 + $0xe8] sm:$0xff]
    %v640 = vld [vmem:[#allocation6 + $0xf0] sm:$0xff]
    %v641 = vld [vmem:[#allocation6 + $0xf8] sm:$0xff]
    %v674 = vunpack.c.l.b16 %v610
    %v675 = vunpack.c.h.b16 %v610
    %v676 = vunpack.c.l.b16 %v611
    %v677 = vunpack.c.h.b16 %v611
    %v678 = vunpack.c.l.b16 %v612
    %v679 = vunpack.c.h.b16 %v612
    %v680 = vunpack.c.l.b16 %v613
    %v681 = vunpack.c.h.b16 %v613
    %v682 = vunpack.c.l.b16 %v614
    %v683 = vunpack.c.h.b16 %v614
    %v684 = vunpack.c.l.b16 %v615
    %v685 = vunpack.c.h.b16 %v615
    %v686 = vunpack.c.l.b16 %v616
    %v687 = vunpack.c.h.b16 %v616
    %v688 = vunpack.c.l.b16 %v617
    %v689 = vunpack.c.h.b16 %v617
    %v690 = vunpack.c.l.b16 %v618
    %v691 = vunpack.c.h.b16 %v618
    %v692 = vunpack.c.l.b16 %v619
    %v693 = vunpack.c.h.b16 %v619
    %v694 = vunpack.c.l.b16 %v620
    %v695 = vunpack.c.h.b16 %v620
    %v696 = vunpack.c.l.b16 %v621
    %v697 = vunpack.c.h.b16 %v621
    %v698 = vunpack.c.l.b16 %v622
    %v699 = vunpack.c.h.b16 %v622
    %v700 = vunpack.c.l.b16 %v623
    %v701 = vunpack.c.h.b16 %v623
    %v702 = vunpack.c.l.b16 %v624
    %v703 = vunpack.c.h.b16 %v624
    %v704 = vunpack.c.l.b16 %v625
    %v705 = vunpack.c.h.b16 %v625
    %v706 = vunpack.c.l.b16 %v626
    %v707 = vunpack.c.h.b16 %v626
    %v708 = vunpack.c.l.b16 %v627
    %v709 = vunpack.c.h.b16 %v627
    %v710 = vunpack.c.l.b16 %v628
    %v711 = vunpack.c.h.b16 %v628
    %v712 = vunpack.c.l.b16 %v629
    %v713 = vunpack.c.h.b16 %v629
    %v714 = vunpack.c.l.b16 %v630
    %v715 = vunpack.c.h.b16 %v630
    %v716 = vunpack.c.l.b16 %v631
    %v717 = vunpack.c.h.b16 %v631
    %v718 = vunpack.c.l.b16 %v632
    %v719 = vunpack.c.h.b16 %v632
    %v720 = vunpack.c.l.b16 %v633
    %v721 = vunpack.c.h.b16 %v633
    %v722 = vunpack.c.l.b16 %v634
    %v723 = vunpack.c.h.b16 %v634
    %v724 = vunpack.c.l.b16 %v635
    %v725 = vunpack.c.h.b16 %v635
    %v726 = vunpack.c.l.b16 %v636
    %v727 = vunpack.c.h.b16 %v636
    %v728 = vunpack.c.l.b16 %v637
    %v729 = vunpack.c.h.b16 %v637
    %v730 = vunpack.c.l.b16 %v638
    %v731 = vunpack.c.h.b16 %v638
    %v732 = vunpack.c.l.b16 %v639
    %v733 = vunpack.c.h.b16 %v639
    %v734 = vunpack.c.l.b16 %v640
    %v735 = vunpack.c.h.b16 %v640
    %v736 = vunpack.c.l.b16 %v641
    %v737 = vunpack.c.h.b16 %v641
    %v738 = vpack.c.b16 %v676, %v674
    %v739 = vpack.c.b16 %v677, %v675
    %v740 = vpack.c.b16 %v680, %v678
    %v741 = vpack.c.b16 %v681, %v679
    %v742 = vpack.c.b16 %v684, %v682
    %v743 = vpack.c.b16 %v685, %v683
    %v744 = vpack.c.b16 %v688, %v686
    %v745 = vpack.c.b16 %v689, %v687
    %v746 = vpack.c.b16 %v692, %v690
    %v747 = vpack.c.b16 %v693, %v691
    %v748 = vpack.c.b16 %v696, %v694
    %v749 = vpack.c.b16 %v697, %v695
    %v750 = vpack.c.b16 %v700, %v698
    %v751 = vpack.c.b16 %v701, %v699
    %v752 = vpack.c.b16 %v704, %v702
    %v753 = vpack.c.b16 %v705, %v703
    %v754 = vpack.c.b16 %v708, %v706
    %v755 = vpack.c.b16 %v709, %v707
    %v756 = vpack.c.b16 %v712, %v710
    %v757 = vpack.c.b16 %v713, %v711
    %v758 = vpack.c.b16 %v716, %v714
    %v759 = vpack.c.b16 %v717, %v715
    %v760 = vpack.c.b16 %v720, %v718
    %v761 = vpack.c.b16 %v721, %v719
    %v762 = vpack.c.b16 %v724, %v722
    %v763 = vpack.c.b16 %v725, %v723
    %v764 = vpack.c.b16 %v728, %v726
    %v765 = vpack.c.b16 %v729, %v727
    %v766 = vpack.c.b16 %v732, %v730
    %v767 = vpack.c.b16 %v733, %v731
    %v768 = vpack.c.b16 %v736, %v734
    %v769 = vpack.c.b16 %v737, %v735
    %802 = vmatprep.subr.bf16.mxu0 %v739
    %803 = vmatpush1.bf16.msra.mxu0 %v738
    %804 = vmatprep.subr.bf16.mxu0 %v741
    %805 = vmatpush1.bf16.msra.mxu0 %v740
    %806 = vmatprep.subr.bf16.mxu0 %v743
    %807 = vmatpush1.bf16.msra.mxu0 %v742
    %808 = vmatprep.subr.bf16.mxu0 %v745
    %809 = vmatpush1.bf16.msra.mxu0 %v744
    %810 = vmatprep.subr.bf16.mxu0 %v747
    %811 = vmatpush1.bf16.msra.mxu0 %v746
    %812 = vmatprep.subr.bf16.mxu0 %v749
    %813 = vmatpush1.bf16.msra.mxu0 %v748
    %814 = vmatprep.subr.bf16.mxu0 %v751
    %815 = vmatpush1.bf16.msra.mxu0 %v750
    %816 = vmatprep.subr.bf16.mxu0 %v753
    %817 = vmatpush1.bf16.msra.mxu0 %v752
    %818 = vmatprep.subr.bf16.mxu0 %v755
    %819 = vmatpush1.bf16.msra.mxu0 %v754
    %820 = vmatprep.subr.bf16.mxu0 %v757
    %821 = vmatpush1.bf16.msra.mxu0 %v756
    %822 = vmatprep.subr.bf16.mxu0 %v759
    %823 = vmatpush1.bf16.msra.mxu0 %v758
    %824 = vmatprep.subr.bf16.mxu0 %v761
    %825 = vmatpush1.bf16.msra.mxu0 %v760
    %826 = vmatprep.subr.bf16.mxu0 %v763
    %827 = vmatpush1.bf16.msra.mxu0 %v762
    %828 = vmatprep.subr.bf16.mxu0 %v765
    %829 = vmatpush1.bf16.msra.mxu0 %v764
    %830 = vmatprep.subr.bf16.mxu0 %v767
    %831 = vmatpush1.bf16.msra.mxu0 %v766
    %832 = vmatprep.subr.bf16.mxu0 %v769
    %833 = vmatpush1.bf16.msra.mxu0 %v768
    %834 = vmatprep.mubr.bf16.mxu0 %v103
    %835 = vmatmul.mubr.bf16.gmra.mrb[0].mxu0 %v102
    %v836 = vpop.f32.mrb[0].mxu0
    %v837 = vadd.f32 0.0, %v836
    %v838 = vpop.f32.mrb[0].mxu0
    %v839 = vadd.f32 0.0, %v838
    %v840 = vpop.f32.mrb[0].mxu0
    %v841 = vadd.f32 0.0, %v840
    %v842 = vpop.f32.mrb[0].mxu0
    %v843 = vadd.f32 0.0, %v842
    %844 = vmatprep.mubr.bf16.mxu0 %v105
    %845 = vmatmul.mubr.bf16.gmra.mrb[0].mxu0 %v104
    %v846 = vpop.f32.mrb[0].mxu0
    %v847 = vadd.f32 0.0, %v846
    %v848 = vpop.f32.mrb[0].mxu0
    %v849 = vadd.f32 0.0, %v848
    %v850 = vpop.f32.mrb[0].mxu0
    %v851 = vpop.f32.mrb[0].mxu0
    %852 = vdwg.mxu0
    %v853 = vmul.f32 %v594, %v837
    %v854 = vmul.f32 %v596, %v839
    %v855 = vmul.f32 %v598, %v841
    %v856 = vmul.f32 %v600, %v843
    %v857 = vmul.f32 %v604, %v847
    %v858 = vmul.f32 %v606, %v849
    %859 = vst [vmem:[%s4] sm:$0xff] %v853
    %860 = vst [vmem:[%s4 + $0x8] sm:$0xff] %v854
    %861 = vst [vmem:[%s4 + $0x10] sm:$0xff] %v855
    %862 = vst [vmem:[%s4 + $0x18] sm:$0xff] %v856
    %863 = vst [vmem:[%s4 + $0x20] sm:$0xff] %v857
    %864 = vst [vmem:[%s4 + $0x28] sm:$0xff] %v858
    // Predicated region
    $region30: #{feed_forward.1} parent=1 // pred_check
      _
    $region31: #{feed_forward.1} parent=1 // pred_check_branch
      %866 = sbr.rel (0) target = $region33
    $region32: #{feed_forward.1} parent=1 // pred_region
      _
    $region33: #{feed_forward.1} parent=1 // pred_fallthru
      _
    // Predicated region
    $region34: #{feed_forward.1} parent=1 // pred_check
      _
    $region35: #{feed_forward.1} parent=1 // pred_check_branch
      %868 = sbr.rel (0) target = $region37
    $region36: #{feed_forward.1} parent=1 // pred_region
      _
    $region37: #{feed_forward.1} parent=1 // pred_fallthru
      _
    %869 = vsyncpa [#allocation3], 1
    %870 = vsyncpa [#allocation5], 1

</llo_original>
